<compile_context>
chip_gen: v7x
topology: tpu7x:2x2x1
jax: 0.10.0
libtpu: 0.0.40
codegen_flags: <defaults>
</compile_context>

<pallas_src>
import functools

import numpy as np
import jax
import jax.numpy as jnp
from jax.experimental import pallas as pl
from jax.experimental.pallas import tpu as pltpu


def _dirichlet_uq_kernel(coef_ref, alpha_ref, targ_ref, glen_ref, out_ref, *, inv_n_groups):
    step = pl.program_id(0)

    @pl.when(step == 0)
    def _init():
        out_ref[0, 0] = 0.0

    coef = coef_ref[0]                                  # scalar (SMEM, resident)
    alpha = alpha_ref[...]                              # [TG, L] f32
    t = targ_ref[...]                                   # [TG, L] f32
    glen_i = glen_ref[...]                              # [TG, 1] i32 (0 for padded rows)

    tg, lp = alpha.shape
    lane = jax.lax.broadcasted_iota(jnp.int32, (tg, lp), 1)
    valid = lane < glen_i                               # [TG, L] bool
    mask = valid.astype(jnp.float32)

    # sum(alpha) over each group (padded lanes zeroed via one multiply)
    alpha_m = alpha * mask
    sum_alpha = jnp.sum(alpha_m, axis=1, keepdims=True)           # [TG, 1]
    inv_sum_alpha = pl.reciprocal(sum_alpha, approx=False)
    pred_p = alpha * inv_sum_alpha                                # garbage in masked lanes is OK

    # masked softmax over the group axis. Padded lanes of `t` replicate an
    # in-group element (gather clamps to the group's last doc), so a plain
    # row max equals the masked max.
    t_max = jnp.max(t, axis=1, keepdims=True)                     # [TG, 1]
    e = jnp.exp(t - t_max)
    denom = jnp.sum(e * mask, axis=1, keepdims=True)              # [TG, 1]
    targ_p = e * pl.reciprocal(denom, approx=False)

    err = (pred_p - targ_p) ** 2
    var = pred_p * (1.0 - pred_p) * pl.reciprocal(sum_alpha + 1.0, approx=False)

    # consist = log(targ_p / pred_p), evaluated in log space (reuses softmax
    # intermediates, avoids exp-underflow -> -inf).
    log_targ = (t - t_max) - jnp.log(denom)
    log_pred = jnp.log(alpha) - jnp.log(sum_alpha)
    penalty = jnp.abs((log_targ - log_pred) * (alpha - 1.0))

    total = err + var + coef * penalty
    # where (not multiply) so that NaN/inf garbage in invalid lanes / padded
    # rows is discarded cleanly.
    row_sum = jnp.sum(jnp.where(valid, total, 0.0), axis=1, keepdims=True)   # [TG, 1]

    glen_f = jnp.maximum(glen_i.astype(jnp.float32), 1.0)         # padded rows -> /1 (row_sum is 0)
    partial = jnp.sum(row_sum * pl.reciprocal(glen_f, approx=False)) * inv_n_groups
    out_ref[0, 0] = out_ref[0, 0] + partial


def dirichlet_uq_pallas(concentration, scope, targets, max_coeff, epoch, epochs,
                        gpu=None, max_rows_per_tile=None):
    """scope: Python list of static group sizes (matches torch .split(scope, dim=0))."""
    del gpu  # device placement is handled by JAX

    scope_np = np.asarray(scope, dtype=np.int64)
    G = int(scope_np.shape[0])
    assert G > 0
    l_max = int(scope_np.max())
    l_pad = max(128, ((l_max + 127) // 128) * 128)                # lane-dense padding

    # Tile rows on the group axis: multiple of 8, ~1 MiB per input block.
    rows_for_budget = max(8, ((1 << 20) // (l_pad * 4)) // 8 * 8)
    row_cap = min(1024, rows_for_budget)
    if max_rows_per_tile is not None:
        row_cap = min(row_cap, max(8, (int(max_rows_per_tile) // 8) * 8))
    tg = int(min(row_cap, ((G + 7) // 8) * 8))
    num_tiles = -(-G // tg)                                       # cdiv
    g_pad = num_tiles * tg

    # Static gather index matrix: row g holds the flat doc indices of group g;
    # padded lanes clamp to the group's last doc; padded rows point at index 0.
    offsets = np.zeros((G,), np.int64)
    offsets[1:] = np.cumsum(scope_np)[:-1]
    lane = np.arange(l_pad, dtype=np.int64)[None, :]
    idx = np.zeros((g_pad, l_pad), np.int32)
    idx[:G] = (offsets[:, None]
               + np.minimum(lane, np.maximum(scope_np[:, None] - 1, 0))).astype(np.int32)

    glen = np.zeros((g_pad, 1), np.int32)
    glen[:G, 0] = scope_np.astype(np.int32)

    idx_j = jnp.asarray(idx)
    conc2d = jnp.take(jnp.asarray(concentration, jnp.float32), idx_j, axis=0)   # [Gpad, Lpad]
    targ2d = jnp.take(jnp.asarray(targets, jnp.float32), idx_j, axis=0)         # [Gpad, Lpad]
    glen_j = jnp.asarray(glen)                                                  # [Gpad, 1]

    annealing_coef = float(max_coeff) * (float(epoch) / (float(epochs) - 1.0)) ** 3
    coef = jnp.asarray([annealing_coef], jnp.float32)             # (1,) scalar in SMEM

    kernel = functools.partial(_dirichlet_uq_kernel, inv_n_groups=float(1.0 / G))

    out = pl.pallas_call(
        kernel,
        out_shape=jax.ShapeDtypeStruct((1, 1), jnp.float32),
        grid_spec=pltpu.PrefetchScalarGridSpec(
            num_scalar_prefetch=0,
            grid=(num_tiles,),
            in_specs=[
                pl.BlockSpec(memory_space=pltpu.SMEM),              # annealing coef (resident)
                pl.BlockSpec((tg, l_pad), lambda g: (g, 0)),        # concentration tile
                pl.BlockSpec((tg, l_pad), lambda g: (g, 0)),        # targets tile
                pl.BlockSpec((tg, 1), lambda g: (g, 0)),            # group lengths tile
            ],
            out_specs=pl.BlockSpec(memory_space=pltpu.SMEM),        # scalar accumulator (resident)
        ),
        compiler_params=pltpu.CompilerParams(
            dimension_semantics=("arbitrary",),
            vmem_limit_bytes=32 * 1024 * 1024,
        ),
    )(coef, conc2d, targ2d, glen_j)
    # torch returns a 1-element tensor; mirror with shape (1,)
    return out.reshape(1)


def dirichlet_uq_reference(concentration, scope, targets, max_coeff, epoch, epochs):
    """Pure-JAX reference mirroring the PyTorch loop exactly."""
    losses = jnp.zeros((1,), jnp.float32)
    off = 0
    coef = float(max_coeff) * (float(epoch) / (float(epochs) - 1.0)) ** 3
    for n in scope:
        alpha = concentration[off:off + n].astype(jnp.float32)
        bt = targets[off:off + n].astype(jnp.float32)
        pred_p = alpha / jnp.sum(alpha)
        targ_p = jax.nn.softmax(bt, axis=0)
        err = (pred_p - targ_p) ** 2
        var = pred_p * (1.0 - pred_p) / (jnp.sum(alpha) + 1.0)
        consist = jnp.log(targ_p / pred_p)
        penalty = jnp.abs(consist * (alpha - 1.0))
        losses = losses + jnp.mean(err + var + coef * penalty)
        off += n
    return losses / len(scope)


if __name__ == "__main__":
    key = jax.random.PRNGKey(0)
    max_coeff, epoch, epochs = 1.0, 5, 10

    # --- case 1: small, single tile ------------------------------------------
    k1, k2, k3, k4 = jax.random.split(key, 4)
    scope1 = [3, 5, 4]                    # 3 query groups, 12 docs total
    n1 = sum(scope1)
    conc1 = jnp.exp(jax.random.normal(k1, (n1,), jnp.float32)) + 0.5   # positive
    targ1 = jax.random.normal(k2, (n1,), jnp.float32)

    out1 = dirichlet_uq_pallas(conc1, scope1, targ1, max_coeff, epoch, epochs)
    out1 = jax.block_until_ready(out1)
    ref1 = dirichlet_uq_reference(conc1, scope1, targ1, max_coeff, epoch, epochs)
    assert out1.shape == (1,)
    assert jnp.allclose(out1, ref1, rtol=1e-5, atol=1e-5), (out1, ref1)

    # --- case 2: more groups, forced multi-tile (exercises grid accumulation) --
    scope2 = [1, 2, 3, 4, 5, 6, 7, 1, 2, 3, 4, 5, 6, 7, 1, 2, 3, 4, 5, 6]  # 20 groups
    n2 = sum(scope2)
    conc2 = jnp.exp(jax.random.normal(k3, (n2,), jnp.float32)) + 0.5
    targ2 = jax.random.normal(k4, (n2,), jnp.float32)

    out2 = dirichlet_uq_pallas(conc2, scope2, targ2, max_coeff, epoch, epochs,
                               max_rows_per_tile=8)    # -> 3 grid steps
    out2 = jax.block_until_ready(out2)
    ref2 = dirichlet_uq_reference(conc2, scope2, targ2, max_coeff, epoch, epochs)
    assert out2.shape == (1,)
    assert jnp.allclose(out2, ref2, rtol=1e-5, atol=1e-5), (out2, ref2)

    print("KERNEL_OK")
</pallas_src>

<mosaic_0001>
module attributes {stable_mosaic.version = 11 : i64} {
  func.func @_dirichlet_uq_kernel(%arg0: i32, %arg1: memref<1xf32, #tpu.memory_space<smem>>, %arg2: memref<8x128xf32, #tpu.memory_space<vmem>>, %arg3: memref<8x128xf32, #tpu.memory_space<vmem>>, %arg4: memref<8x1xi32, #tpu.memory_space<vmem>>, %arg5: memref<1x1xf32, #tpu.memory_space<smem>>) attributes {dimension_semantics = [#tpu.dimension_semantics<arbitrary>], iteration_bounds = array<i64: 1>, scalar_prefetch = 0 : i64, scratch_operands = 0 : i64, tpu.core_type = #tpu.core_type<tc>, window_params = [{transform_indices = @transform_0, window_bounds = array<i64: 1>}, {transform_indices = @transform_1, window_bounds = array<i64: 8, 128>}, {transform_indices = @transform_2, window_bounds = array<i64: 8, 128>}, {transform_indices = @transform_3, window_bounds = array<i64: 8, 1>}, {transform_indices = @transform_4, window_bounds = array<i64: 1, 1>}]} {
    %c0_i32 = arith.constant 0 : i32
    %0 = arith.cmpi eq, %arg0, %c0_i32 : i32
    %1 = arith.extui %0 : i1 to i32
    %c0_i32_0 = arith.constant 0 : i32
    %2 = arith.cmpi ne, %1, %c0_i32_0 : i32
    scf.if %2 {
      %cst_21 = arith.constant 0.000000e+00 : f32
      %c0_22 = arith.constant 0 : index
      %c0_23 = arith.constant 0 : index
      %74 = memref.load %arg5[%c0_22, %c0_23] : memref<1x1xf32, #tpu.memory_space<smem>>
      memref.store %cst_21, %arg5[%c0_22, %c0_23] : memref<1x1xf32, #tpu.memory_space<smem>>
    } else {
    }
    %c0 = arith.constant 0 : index
    %3 = memref.load %arg1[%c0] : memref<1xf32, #tpu.memory_space<smem>>
    %c0_1 = arith.constant 0 : index
    %c0_2 = arith.constant 0 : index
    %4 = vector.load %arg2[%c0_1, %c0_2] : memref<8x128xf32, #tpu.memory_space<vmem>>, vector<8x128xf32>
    %c0_3 = arith.constant 0 : index
    %c0_4 = arith.constant 0 : index
    %5 = vector.load %arg3[%c0_3, %c0_4] : memref<8x128xf32, #tpu.memory_space<vmem>>, vector<8x128xf32>
    %c0_5 = arith.constant 0 : index
    %c0_6 = arith.constant 0 : index
    %6 = vector.load %arg4[%c0_5, %c0_6] : memref<8x1xi32, #tpu.memory_space<vmem>>, vector<8x1xi32>
    %7 = tpu.iota {dimensions = array<i32: 1>} : vector<8x128xi32>
    %8 = vector.broadcast %6 : vector<8x1xi32> to vector<8x128xi32>
    %9 = arith.cmpi slt, %7, %8 : vector<8x128xi32>
    %10 = arith.extui %9 : vector<8x128xi1> to vector<8x128xi32>
    %11 = arith.sitofp %10 : vector<8x128xi32> to vector<8x128xf32>
    %12 = arith.mulf %4, %11 : vector<8x128xf32>
    %cst = arith.constant dense<0.000000e+00> : vector<8xf32>
    %13 = vector.multi_reduction <add>, %12, %cst [1] : vector<8x128xf32> to vector<8xf32>
    %14 = vector.shape_cast %13 : vector<8xf32> to vector<8x1xf32>
    %15 = tpu.reciprocal %14 : vector<8x1xf32> -> vector<8x1xf32>
    %16 = vector.broadcast %15 : vector<8x1xf32> to vector<8x128xf32>
    %17 = arith.mulf %4, %16 : vector<8x128xf32>
    %cst_7 = arith.constant dense<0xFF800000> : vector<8xf32>
    %18 = vector.multi_reduction <maximumf>, %5, %cst_7 [1] : vector<8x128xf32> to vector<8xf32>
    %19 = vector.shape_cast %18 : vector<8xf32> to vector<8x1xf32>
    %20 = vector.broadcast %19 : vector<8x1xf32> to vector<8x128xf32>
    %21 = arith.subf %5, %20 : vector<8x128xf32>
    %22 = math.exp %21 : vector<8x128xf32>
    %23 = arith.mulf %22, %11 : vector<8x128xf32>
    %cst_8 = arith.constant dense<0.000000e+00> : vector<8xf32>
    %24 = vector.multi_reduction <add>, %23, %cst_8 [1] : vector<8x128xf32> to vector<8xf32>
    %25 = vector.shape_cast %24 : vector<8xf32> to vector<8x1xf32>
    %26 = tpu.reciprocal %25 : vector<8x1xf32> -> vector<8x1xf32>
    %27 = vector.broadcast %26 : vector<8x1xf32> to vector<8x128xf32>
    %28 = arith.mulf %22, %27 : vector<8x128xf32>
    %29 = arith.subf %17, %28 : vector<8x128xf32>
    %30 = arith.mulf %29, %29 : vector<8x128xf32>
    %cst_9 = arith.constant 1.000000e+00 : f32
    %31 = vector.broadcast %cst_9 : f32 to vector<8x128xf32>
    %32 = arith.subf %31, %17 : vector<8x128xf32>
    %33 = arith.mulf %17, %32 : vector<8x128xf32>
    %cst_10 = arith.constant 1.000000e+00 : f32
    %34 = vector.broadcast %cst_10 : f32 to vector<8x1xf32>
    %35 = arith.addf %14, %34 : vector<8x1xf32>
    %36 = tpu.reciprocal %35 : vector<8x1xf32> -> vector<8x1xf32>
    %37 = vector.broadcast %36 : vector<8x1xf32> to vector<8x128xf32>
    %38 = arith.mulf %33, %37 : vector<8x128xf32>
    %39 = vector.broadcast %19 : vector<8x1xf32> to vector<8x128xf32>
    %40 = arith.subf %5, %39 : vector<8x128xf32>
    %41 = math.log %25 : vector<8x1xf32>
    %42 = vector.broadcast %41 : vector<8x1xf32> to vector<8x128xf32>
    %43 = arith.subf %40, %42 : vector<8x128xf32>
    %44 = math.log %4 : vector<8x128xf32>
    %45 = math.log %14 : vector<8x1xf32>
    %46 = vector.broadcast %45 : vector<8x1xf32> to vector<8x128xf32>
    %47 = arith.subf %44, %46 : vector<8x128xf32>
    %48 = arith.subf %43, %47 : vector<8x128xf32>
    %cst_11 = arith.constant 1.000000e+00 : f32
    %49 = vector.broadcast %cst_11 : f32 to vector<8x128xf32>
    %50 = arith.subf %4, %49 : vector<8x128xf32>
    %51 = arith.mulf %48, %50 : vector<8x128xf32>
    %52 = math.absf %51 : vector<8x128xf32>
    %53 = arith.addf %30, %38 : vector<8x128xf32>
    %54 = vector.broadcast %3 : f32 to vector<8x128xf32>
    %55 = arith.mulf %54, %52 : vector<8x128xf32>
    %56 = arith.addf %53, %55 : vector<8x128xf32>
    %cst_12 = arith.constant 0.000000e+00 : f32
    %57 = vector.broadcast %cst_12 : f32 to vector<8x128xf32>
    %58 = arith.select %9, %56, %57 : vector<8x128xi1>, vector<8x128xf32>
    %cst_13 = arith.constant dense<0.000000e+00> : vector<8xf32>
    %59 = vector.multi_reduction <add>, %58, %cst_13 [1] : vector<8x128xf32> to vector<8xf32>
    %60 = vector.shape_cast %59 : vector<8xf32> to vector<8x1xf32>
    %61 = arith.sitofp %6 : vector<8x1xi32> to vector<8x1xf32>
    %cst_14 = arith.constant 1.000000e+00 : f32
    %62 = vector.broadcast %cst_14 : f32 to vector<8x1xf32>
    %63 = arith.maximumf %61, %62 : vector<8x1xf32>
    %64 = tpu.reciprocal %63 : vector<8x1xf32> -> vector<8x1xf32>
    %65 = arith.mulf %60, %64 : vector<8x1xf32>
    %66 = vector.shape_cast %65 : vector<8x1xf32> to vector<1x8x1xf32>
    %cst_15 = arith.constant dense<0.000000e+00> : vector<1xf32>
    %67 = vector.multi_reduction <add>, %66, %cst_15 [1, 2] : vector<1x8x1xf32> to vector<1xf32>
    %68 = vector.shape_cast %67 : vector<1xf32> to vector<1x1x1xf32>
    %69 = vector.extract %68[0, 0, 0] : f32 from vector<1x1x1xf32>
    %cst_16 = arith.constant 0.333333343 : f32
    %70 = arith.mulf %69, %cst_16 : f32
    %c0_17 = arith.constant 0 : index
    %c0_18 = arith.constant 0 : index
    %71 = memref.load %arg5[%c0_17, %c0_18] : memref<1x1xf32, #tpu.memory_space<smem>>
    %72 = arith.addf %71, %70 : f32
    %c0_19 = arith.constant 0 : index
    %c0_20 = arith.constant 0 : index
    %73 = memref.load %arg5[%c0_19, %c0_20] : memref<1x1xf32, #tpu.memory_space<smem>>
    memref.store %72, %arg5[%c0_19, %c0_20] : memref<1x1xf32, #tpu.memory_space<smem>>
    return
  }
  func.func @transform_0(%arg0: i32) -> i32 {
    %c0_i32 = arith.constant 0 : i32
    %c0_i32_0 = arith.constant 0 : i32
    return %c0_i32 : i32
  }
  func.func @transform_1(%arg0: i32) -> (i32, i32) {
    %c0_i32 = arith.constant 0 : i32
    %c0_i32_0 = arith.constant 0 : i32
    return %arg0, %c0_i32 : i32, i32
  }
  func.func @transform_2(%arg0: i32) -> (i32, i32) {
    %c0_i32 = arith.constant 0 : i32
    %c0_i32_0 = arith.constant 0 : i32
    return %arg0, %c0_i32 : i32, i32
  }
  func.func @transform_3(%arg0: i32) -> (i32, i32) {
    %c0_i32 = arith.constant 0 : i32
    %c0_i32_0 = arith.constant 0 : i32
    return %arg0, %c0_i32 : i32, i32
  }
  func.func @transform_4(%arg0: i32) -> (i32, i32) {
    %c0_i32 = arith.constant 0 : i32
    %c0_i32_0 = arith.constant 0 : i32
    %c0_i32_1 = arith.constant 0 : i32
    return %c0_i32, %c0_i32_0 : i32, i32
  }
}

</mosaic_0001>

<llo_original>
// kernel: tpu_custom_call.1
$region0: #{tpu_custom_call.1}
  #allocation0 [shape = 'u32[]', space=smem, size = 0x4, offset = 0x4, fixed_abs, tag = 'smem constant byte address 0x4 - core index']
  #allocation1 [shape = 'u32[144,128]{1,0:T(1,128)}', space=vmem, size = 0x12000, scoped, tag = 'internal scratch']
  #allocation2 [shape = 'f32[1]{0:T(128)S(6)}', space=smem, size = 0x200, scoped, tag = 'scoped memory for tpu_custom_call.1']
  %s0 = inlined_call_operand.<no memory space> [shape: f32[1], index: 0, kind: input, shape index: {}]
  %s1 = inlined_call_operand.vmem [shape: f32[8,128], index: 1, kind: input, shape index: {}]
  %s2 = inlined_call_operand.vmem [shape: f32[8,128], index: 2, kind: input, shape index: {}]
  %s3 = inlined_call_operand.vmem [shape: s32[8,1], index: 3, kind: input, shape index: {}]
  %s4 = inlined_call_operand.hbm [shape: f32[1,1], index: 4, kind: output, shape index: {}]
  %s5 = sld [smem:[#allocation0]]
  $region30: #{tpu_custom_call.1} parent=0
    _
  %s7 = ssub.s32 1, %s5
  %s8 = scalar_select 0, %s7, %s5
  %9 = sst [smem:[#allocation2]] %s0
  $region1: #{tpu_custom_call.1} parent=0
    #allocation3 [shape = 'u8[512]{0}', space=smem, size = 0x200, scoped, tag = 'output window, operand 0, single buffered']
    #allocation4 [shape = 's32[1]{0}', space=sflag, size = 0x4, scoped, tag = 'scoped memory for tpu_custom_call.1']
    %10 = vsyncpa [#allocation4], 0
    // Predicated region
    $region2: #{tpu_custom_call.1} parent=1 // pred_check
      _
    $region3: #{tpu_custom_call.1} parent=1 // pred_check_branch
      %12 = sbr.rel (0) target = $region5
    $region4: #{tpu_custom_call.1} parent=1 // pred_region
      _
    $region5: #{tpu_custom_call.1} parent=1 // pred_fallthru
      _
    // Predicated region
    $region6: #{tpu_custom_call.1} parent=1 // pred_check
      _
    $region7: #{tpu_custom_call.1} parent=1 // pred_check_branch
      %14 = sbr.rel (0) target = $region9
    $region8: #{tpu_custom_call.1} parent=1 // pred_region
      _
    $region9: #{tpu_custom_call.1} parent=1 // pred_fallthru
      _
    // Predicated region
    $region10: #{tpu_custom_call.1} parent=1 // pred_check
      _
    $region11: #{tpu_custom_call.1} parent=1 // pred_check_branch
      %16 = sbr.rel (0) target = $region13
    $region12: #{tpu_custom_call.1} parent=1 // pred_region
      _
    $region13: #{tpu_custom_call.1} parent=1 // pred_fallthru
      _
    // Predicated region
    $region14: #{tpu_custom_call.1} parent=1 // pred_check
      _
    $region15: #{tpu_custom_call.1} parent=1 // pred_check_branch
      %18 = sbr.rel (0) target = $region17
    $region16: #{tpu_custom_call.1} parent=1 // pred_region
      _
    $region17: #{tpu_custom_call.1} parent=1 // pred_fallthru
      _
    %p19 = scmp.eq.s32.totalorder 0, 0
    // Predicated region
    $region18: #{tpu_custom_call.1} parent=1 // pred_check
      %p20 = pneg %p19
    $region19: #{tpu_custom_call.1} parent=1 // pred_check_branch
      %22 = sbr.rel (%p20) target = $region21
    $region20: #{tpu_custom_call.1} parent=1 // pred_region
      %s23 = scalar_lea.smem [#allocation3], 0
      %24 = sst [smem:[%s23]] 0.0
    $region21: #{tpu_custom_call.1} parent=1 // pred_fallthru
      _
    %s25 = sld [smem:[#allocation2]]
    %v26 = vld [vmem:[%s1] sm:$0xff]
    %v27 = vld [vmem:[%s2] sm:$0xff]
    %v28 = vld [vmem:[%s3] sm:$0xff]
    %v29 = vlaneseq
    %v30 = vand.u32 %v29, 127
    %31 = vset.pattern.permute.xlu0 0
    %32 = vperm.xlu0 %31, %v28
    %v33 = vpop.permute.xlu0 %32
    %vm34 = vcmp.lt.s32.totalorder %v30, %v33
    %v35 = vsel %vm34, 1, 0
    %v36 = vcvt.s32.f32 %v35
    %v37 = vmul.f32 %v26, %v36
    %38 = vadd.xlane.f32.xlu0 %v37
    %v39 = vpop.xlane.xlu0 %38
    %v40 = vrcp.pop %v39
    %v41 = vmul.f32 %v26, %v40
    %42 = vmax.xlane.f32.xlu0 %v27
    %v43 = vpop.xlane.xlu0 %42
    %v44 = vsub.f32 %v27, %v43
    %v45 = vmul.f32 %v44, 1.442695
    %v46 = vpow.pop %v45
    %v47 = vmul.f32 %v46, %v36
    %48 = vadd.xlane.f32.xlu0 %v47
    %v49 = vpop.xlane.xlu0 %48
    %v50 = vrcp.pop %v49
    %v51 = vmul.f32 %v46, %v50
    %v52 = vsub.f32 %v41, %v51
    %v53 = vmul.f32 %v52, %v52
    %v54 = vsub.f32 1.0, %v41
    %v55 = vmul.f32 %v41, %v54
    %v56 = vadd.f32 %v39, 1.0
    %v57 = vrcp.pop %v56
    %v58 = vmul.f32 %v55, %v57
    %v59 = vlog2.pop %v49
    %v60 = vmul.f32 %v59, 0.6931472
    %v61 = vsub.f32 %v44, %v60
    %v62 = vlog2.pop %v26
    %v63 = vmul.f32 %v62, 0.6931472
    %v64 = vlog2.pop %v39
    %v65 = vmul.f32 %v64, 0.6931472
    %v66 = vsub.f32 %v63, %v65
    %v67 = vsub.f32 %v61, %v66
    %v68 = vsub.f32 %v26, 1.0
    %v69 = vmul.f32 %v67, %v68
    %v70 = vand.u32 2147483647, %v69
    %v71 = vadd.f32 %v53, %v58
    %v72 = vstv %s25
    %v73 = vmul.f32 %v72, %v70
    %v74 = vadd.f32 %v71, %v73
    %v75 = vsel %vm34, %v74, 0.0
    %76 = vadd.xlane.f32.xlu0 %v75
    %v77 = vpop.xlane.xlu0 %76
    %v78 = vcvt.s32.f32 %v28
    %v79 = vmax.f32 %v78, 1.0
    %v80 = vrcp.pop %v79
    %v81 = vmul.f32 %v77, %v80
    %vm82 = vcmask 7168
    %v83 = vsel %vm82, %v81, 0.0
    %84 = vadd.xlane.f32.xlu0 %v83
    %v85 = vpop.xlane.xlu0 %84
    %v86 = vrot.slane %v85, 4
    %v87 = vadd.f32 %v85, %v86
    %v88 = vrot.slane %v87, 2
    %v89 = vadd.f32 %v87, %v88
    %v90 = vrot.slane %v89, 1
    %v91 = vadd.f32 %v89, %v90
    %s92 = vtos %v91
    %s93 = smul.f32 %s92, 0.33333334
    %s94 = sld [smem:[#allocation3]]
    %s95 = sadd.f32 %s94, %s93
    %s96 = scalar_lea.smem [#allocation3], 0
    %97 = sst [smem:[%s96]] %s95
    // Predicated region
    $region22: #{tpu_custom_call.1} parent=1 // pred_check
      _
    $region23: #{tpu_custom_call.1} parent=1 // pred_check_branch
      %99 = sbr.rel (0) target = $region25
    $region24: #{tpu_custom_call.1} parent=1 // pred_region
      %s101 = ssub.s32 16, 16
      %102 = vsyncadd [#allocation4], %s101
      %105 = dma.smem_to_hbm [#allocation3], 16, %s4, [#allocation4]
    $region25: #{tpu_custom_call.1} parent=1 // pred_fallthru
      _
    // Predicated region
    $region26: #{tpu_custom_call.1} parent=1 // pred_check
      _
    $region27: #{tpu_custom_call.1} parent=1 // pred_check_branch
      %107 = sbr.rel (0) target = $region29
    $region28: #{tpu_custom_call.1} parent=1 // pred_region
      %108 = dma.done [#allocation4], 16
    $region29: #{tpu_custom_call.1} parent=1 // pred_fallthru
      _
    %109 = sfence
    %110 = vsyncpa [#allocation4], 1

</llo_original>
